<compile_context>
chip_gen: v6e
topology: v6e:2x2x1
jax: 0.10.0
libtpu: 0.0.40
codegen_flags: <defaults>
</compile_context>

<pallas_src>
import functools

import jax
import jax.numpy as jnp
from jax.experimental import pallas as pl
from jax.experimental.pallas import tpu as pltpu

_TILE_BUDGET_BYTES = 4 * 1024 * 1024   # per input buffer (x2 double-buffered)
_LANE_CAP = 2048                        # max lane-tile width


@functools.lru_cache(maxsize=1)
def _vmem_limit_bytes():
    cap = 64 * 1024 * 1024              # conservative fallback (v7x physical)
    try:
        cap = int(pltpu.get_tpu_info().vmem_capacity_bytes)
    except Exception:
        pass
    # 96 MiB on v5e/v6e (128 MiB physical), 48 MiB on v7x (64 MiB physical).
    return int(min((cap * 3) // 4, 96 * 1024 * 1024))


def _choose_lane_tile(hw, itemsize):
    """Returns (tile_width, padded_hw). tile_width divides padded_hw."""
    if hw % 128 == 0:
        tw = min(hw, _LANE_CAP)
        while hw % tw != 0:
            tw -= 128
        return tw, hw
    # Ragged last dim: take it whole only while an 8-row f32 strip stays small;
    # otherwise pad to a 128 multiple in the wrapper and tile normally.
    if hw * 4 * 8 <= _TILE_BUDGET_BYTES:
        return hw, hw
    padded = ((hw + 127) // 128) * 128
    tw = min(padded, _LANE_CAP)
    while padded % tw != 0:
        tw -= 128
    return tw, padded


def _choose_row_tile(num_rows, row_bytes, pack):
    max_rows = max(pack, _TILE_BUDGET_BYTES // max(row_bytes, 1))
    if num_rows <= max_rows:
        return num_rows
    return max(pack, (max_rows // pack) * pack)   # keep sublane packing


def _mean_rows_kernel(x_ref, o_ref, acc_ref, *, total_rows, tile_rows,
                      blocks_per_split, full_blocks, needs_mask, acc_rows):
    """x_ref: (TR, TW); o_ref: (1, TW) f32 partial sum; acc_ref: (acc_rows, TW) f32."""
    r = pl.program_id(2)                 # reduction step (innermost grid axis)

    @pl.when(r == 0)
    def _():
        acc_ref[...] = jnp.zeros_like(acc_ref)

    tw = x_ref.shape[-1]

    def partial_sum(x):                  # (TR, TW) f32 -> (acc_rows, TW) f32
        if acc_rows == 8:
            # Fold to 8 rows with vreg-vs-vreg VPU adds only (no XLU per step).
            return jnp.sum(x.reshape(tile_rows // 8, 8, tw), axis=0)
        return jnp.sum(x, axis=0, keepdims=True)

    if needs_mask:
        block_global = pl.program_id(0) * blocks_per_split + r

        @pl.when(block_global < full_blocks)      # fully in-range block: plain sum
        def _():
            acc_ref[...] += partial_sum(x_ref[...].astype(jnp.float32))

        @pl.when(block_global >= full_blocks)     # boundary / clamped block: mask rows
        def _():
            x = x_ref[...].astype(jnp.float32)
            row_ids = (jax.lax.broadcasted_iota(jnp.int32, x.shape, 0)
                       + block_global * tile_rows)
            x = jnp.where(row_ids < total_rows, x, 0.0)
            acc_ref[...] += partial_sum(x)
    else:
        acc_ref[...] += partial_sum(x_ref[...].astype(jnp.float32))

    @pl.when(r == pl.num_programs(2) - 1)
    def _():
        # Single cross-sublane reduce per output tile; scale happens outside.
        o_ref[...] = jnp.sum(acc_ref[...], axis=0, keepdims=True)


def mean_dim(x: jax.Array, *, row_block=None, min_pallas_bytes=1 << 20,
             split_rows=True) -> jax.Array:
    """Equivalent of torch.mean(x, (0, 1), keepdim=True) for a 4-D input."""
    N, C, H, W = x.shape
    NR, HW = N * C, H * W
    dtype = x.dtype
    itemsize = x.dtype.itemsize

    # Tiny inputs: XLA's fused reduce beats any Pallas launch.
    if x.size * itemsize < min_pallas_bytes:
        return jnp.mean(x, axis=(0, 1), keepdims=True)

    # Metadata-only reshape (NCHW contiguous): reduction rows x lane-dense cols.
    x2 = x.reshape(NR, HW)

    pack = max(8, 32 // max(itemsize, 1))          # sublane packing per dtype
    TW, padded_hw = _choose_lane_tile(HW, itemsize)
    if padded_hw != HW:
        x2 = jnp.pad(x2, ((0, 0), (0, padded_hw - HW)))

    if row_block is not None:
        TR = min(row_block, NR)
    else:
        TR = _choose_row_tile(NR, TW * itemsize, pack)

    num_w = padded_hw // TW
    num_blocks = pl.cdiv(NR, TR)
    S = 2 if (split_rows and num_blocks >= 2) else 1   # row-range splits (v7x: 2 TCs)
    bps = pl.cdiv(num_blocks, S)                       # row blocks per split
    needs_clamp = S * bps > num_blocks
    needs_mask = (NR % TR != 0) or needs_clamp
    full_blocks = NR // TR
    acc_rows = 8 if TR % 8 == 0 else 1

    kernel = functools.partial(
        _mean_rows_kernel,
        total_rows=NR, tile_rows=TR, blocks_per_split=bps,
        full_blocks=full_blocks, needs_mask=needs_mask, acc_rows=acc_rows)

    if needs_clamp:
        def x_map(s, j, r, _bps=bps, _nb=num_blocks):
            return (jnp.minimum(s * _bps + r, _nb - 1), j)
    else:
        def x_map(s, j, r, _bps=bps):
            return (s * _bps + r, j)

    partials = pl.pallas_call(
        kernel,
        out_shape=jax.ShapeDtypeStruct((S, padded_hw), jnp.float32),
        grid_spec=pltpu.PrefetchScalarGridSpec(
            num_scalar_prefetch=0,
            grid=(S, num_w, bps),                      # reduction axis last
            in_specs=[pl.BlockSpec((TR, TW), x_map)],
            out_specs=pl.BlockSpec((1, TW), lambda s, j, r: (s, j)),
            scratch_shapes=[pltpu.VMEM((acc_rows, TW), jnp.float32)],
        ),
        compiler_params=pltpu.CompilerParams(
            dimension_semantics=("parallel", "parallel", "arbitrary"),
            vmem_limit_bytes=_vmem_limit_bytes(),
        ),
        cost_estimate=pl.CostEstimate(
            flops=NR * padded_hw,
            transcendentals=0,
            bytes_accessed=NR * padded_hw * itemsize + S * padded_hw * 4,
        ),
    )(x2)

    # Combine the per-split f32 partial sums and scale exactly once (tiny op).
    mean_f32 = jnp.sum(partials, axis=0) * jnp.float32(1.0 / NR)
    return mean_f32[:HW].astype(dtype).reshape(1, 1, H, W)


if __name__ == "__main__":
    keys = jax.random.split(jax.random.PRNGKey(0), 6)

    # 1) Module's reference shape (4,4,4,4), forced through the Pallas path.
    x = jax.random.uniform(keys[0], (4, 4, 4, 4), dtype=jnp.float32)
    out = jax.block_until_ready(mean_dim(x, min_pallas_bytes=0))
    ref = jnp.mean(x, axis=(0, 1), keepdims=True)
    assert out.shape == (1, 1, 4, 4), out.shape
    assert jnp.allclose(out, ref, atol=1e-6, rtol=1e-6)

    # 2) Same shape via the default small-input fast path.
    out_fp = jax.block_until_ready(mean_dim(x))
    assert jnp.allclose(out_fp, ref, atol=1e-6, rtol=1e-6)

    # 3) Multi-block reduction with a ragged final row block (mask on last block only),
    #    split across the two-way "parallel" row-range axis.
    y = jax.random.uniform(keys[1], (6, 5, 8, 16), dtype=jnp.float32)
    out2 = jax.block_until_ready(mean_dim(y, row_block=8, min_pallas_bytes=0))
    ref2 = jnp.mean(y, axis=(0, 1), keepdims=True)
    assert out2.shape == (1, 1, 8, 16), out2.shape
    assert jnp.allclose(out2, ref2, atol=1e-5, rtol=1e-5)

    # 4) Odd number of row blocks: exercises the clamped index_map + fully-masked block.
    z = jax.random.uniform(keys[2], (6, 4, 8, 16), dtype=jnp.float32)
    out3 = jax.block_until_ready(mean_dim(z, row_block=8, min_pallas_bytes=0))
    ref3 = jnp.mean(z, axis=(0, 1), keepdims=True)
    assert jnp.allclose(out3, ref3, atol=1e-5, rtol=1e-5)

    # 5) Wide lane dimension: multiple lane chunks (num_w > 1).
    w = jax.random.uniform(keys[3], (2, 4, 64, 64), dtype=jnp.float32)
    out4 = jax.block_until_ready(mean_dim(w, min_pallas_bytes=0))
    ref4 = jnp.mean(w, axis=(0, 1), keepdims=True)
    assert jnp.allclose(out4, ref4, atol=1e-5, rtol=1e-5)

    # 6) Row count not a multiple of 8 (single-block, (1, TW) accumulator path).
    v = jax.random.uniform(keys[4], (3, 2, 8, 16), dtype=jnp.float32)
    out5 = jax.block_until_ready(mean_dim(v, min_pallas_bytes=0))
    ref5 = jnp.mean(v, axis=(0, 1), keepdims=True)
    assert jnp.allclose(out5, ref5, atol=1e-6, rtol=1e-6)

    # 7) bf16 input: f32 accumulation inside the kernel.
    b = jax.random.uniform(keys[5], (6, 5, 8, 16), dtype=jnp.bfloat16)
    out6 = jax.block_until_ready(mean_dim(b, row_block=8, min_pallas_bytes=0))
    ref6 = jnp.mean(b.astype(jnp.float32), axis=(0, 1), keepdims=True).astype(jnp.bfloat16)
    assert jnp.allclose(out6.astype(jnp.float32), ref6.astype(jnp.float32),
                        atol=1e-2, rtol=1e-2)

    print("KERNEL_OK")
</pallas_src>

<mosaic_0001>
module attributes {stable_mosaic.version = 11 : i64} {
  func.func @_mean_rows_kernel(%arg0: i32, %arg1: i32, %arg2: i32, %arg3: memref<16x16xf32, #tpu.memory_space<vmem>>, %arg4: memref<1x16xf32, #tpu.memory_space<vmem>>, %arg5: memref<8x16xf32, #tpu.memory_space<vmem>>) attributes {dimension_semantics = [#tpu.dimension_semantics<parallel>, #tpu.dimension_semantics<parallel>, #tpu.dimension_semantics<arbitrary>], iteration_bounds = array<i64: 1, 1, 1>, scalar_prefetch = 0 : i64, scratch_operands = 1 : i64, tpu.core_type = #tpu.core_type<tc>, window_params = [{transform_indices = @transform_0, window_bounds = array<i64: 16, 16>}, {transform_indices = @transform_1, window_bounds = array<i64: 1, 16>}]} {
    %c0_i32 = arith.constant 0 : i32
    %0 = arith.cmpi eq, %arg2, %c0_i32 : i32
    %1 = arith.extui %0 : i1 to i32
    %c0_i32_0 = arith.constant 0 : i32
    %2 = arith.cmpi ne, %1, %c0_i32_0 : i32
    scf.if %2 {
      %cst_8 = arith.constant 0.000000e+00 : f32
      %12 = vector.broadcast %cst_8 : f32 to vector<8x16xf32>
      %c0_9 = arith.constant 0 : index
      %c0_10 = arith.constant 0 : index
      %13 = vector.load %arg5[%c0_9, %c0_10] : memref<8x16xf32, #tpu.memory_space<vmem>>, vector<8x16xf32>
      tpu.vector_store %arg5[%c0_9, %c0_10], %12 {strides = array<i32>} : memref<8x16xf32, #tpu.memory_space<vmem>>, vector<8x16xf32>,
    } else {
    }
    %c0 = arith.constant 0 : index
    %c0_1 = arith.constant 0 : index
    %3 = vector.load %arg5[%c0, %c0_1] : memref<8x16xf32, #tpu.memory_space<vmem>>, vector<8x16xf32>
    %c0_2 = arith.constant 0 : index
    %c0_3 = arith.constant 0 : index
    %4 = vector.load %arg3[%c0_2, %c0_3] : memref<16x16xf32, #tpu.memory_space<vmem>>, vector<16x16xf32>
    %5 = vector.shape_cast %4 : vector<16x16xf32> to vector<2x8x16xf32>
    %cst = arith.constant dense<0.000000e+00> : vector<8x16xf32>
    %6 = vector.multi_reduction <add>, %5, %cst [0] : vector<2x8x16xf32> to vector<8x16xf32>
    %7 = arith.addf %3, %6 : vector<8x16xf32>
    %c0_4 = arith.constant 0 : index
    %c0_5 = arith.constant 0 : index
    %8 = vector.load %arg5[%c0_4, %c0_5] : memref<8x16xf32, #tpu.memory_space<vmem>>, vector<8x16xf32>
    tpu.vector_store %arg5[%c0_4, %c0_5], %7 {strides = array<i32>} : memref<8x16xf32, #tpu.memory_space<vmem>>, vector<8x16xf32>,
    %c0_i32_6 = arith.constant 0 : i32
    %9 = arith.cmpi eq, %arg2, %c0_i32_6 : i32
    %10 = arith.extui %9 : i1 to i32
    %c0_i32_7 = arith.constant 0 : i32
    %11 = arith.cmpi ne, %10, %c0_i32_7 : i32
    scf.if %11 {
      %c0_8 = arith.constant 0 : index
      %c0_9 = arith.constant 0 : index
      %12 = vector.load %arg5[%c0_8, %c0_9] : memref<8x16xf32, #tpu.memory_space<vmem>>, vector<8x16xf32>
      %cst_10 = arith.constant dense<0.000000e+00> : vector<16xf32>
      %13 = vector.multi_reduction <add>, %12, %cst_10 [0] : vector<8x16xf32> to vector<16xf32>
      %14 = vector.shape_cast %13 : vector<16xf32> to vector<1x16xf32>
      %c0_11 = arith.constant 0 : index
      %c0_12 = arith.constant 0 : index
      %15 = vector.load %arg4[%c0_11, %c0_12] : memref<1x16xf32, #tpu.memory_space<vmem>>, vector<1x16xf32>
      tpu.vector_store %arg4[%c0_11, %c0_12], %14 {strides = array<i32>} : memref<1x16xf32, #tpu.memory_space<vmem>>, vector<1x16xf32>,
    } else {
    }
    return
  }
  func.func @transform_0(%arg0: i32, %arg1: i32, %arg2: i32) -> (i32, i32) {
    %c1_i32 = arith.constant 1 : i32
    %0 = arith.muli %arg0, %c1_i32 : i32
    %1 = arith.addi %0, %arg2 : i32
    %c0_i32 = arith.constant 0 : i32
    return %1, %arg1 : i32, i32
  }
  func.func @transform_1(%arg0: i32, %arg1: i32, %arg2: i32) -> (i32, i32) {
    %c0_i32 = arith.constant 0 : i32
    return %arg0, %arg1 : i32, i32
  }
}

</mosaic_0001>

<llo_original>
// kernel: tpu_custom_call.1
$region0: #{tpu_custom_call.1}
  #allocation0 [shape = 'u32[]', space=smem, size = 0x4, offset = 0x4, fixed_abs, tag = 'smem constant byte address 0x4 - core index']
  #allocation1 [shape = 'u32[144,128]{1,0:T(1,128)}', space=vmem, size = 0x12000, scoped, tag = 'internal scratch']
  #allocation2 [shape = 'f32[8,16]{1,0:T(8,128)}', space=vmem, size = 0x1000, scoped, tag = 'scratch operand']
  %s0 = inlined_call_operand.hbm [shape: f32[16,16], index: 0, kind: input, shape index: {}]
  %s1 = inlined_call_operand.hbm [shape: f32[1,16], index: 1, kind: output, shape index: {}]
  %s2 = sld [smem:[#allocation0]]
  $region26: #{tpu_custom_call.1} parent=0
    _
  %s4 = ssub.s32 1, %s2
  %s5 = scalar_select 0, %s4, %s2
  $region1: #{tpu_custom_call.1} parent=0
    #allocation3 [shape = 'u8[8192]{0}', space=vmem, size = 0x2000, scoped, tag = 'input window, operand 0, single buffered']
    #allocation4 [shape = 's32[1]{0}', space=sflag, size = 0x4, scoped, tag = 'scoped memory for tpu_custom_call.1']
    #allocation5 [shape = 's32[1]{0}', space=sflag, size = 0x4, scoped, tag = 'scoped memory for tpu_custom_call.1']
    #allocation6 [shape = 'u8[512]{0}', space=vmem, size = 0x400, scoped, tag = 'output window, operand 0, single buffered']
    %6 = vsyncpa [#allocation4], 0
    %7 = vsyncpa [#allocation5], 0
    // Predicated region
    $region2: #{tpu_custom_call.1} parent=1 // pred_check
      _
    $region3: #{tpu_custom_call.1} parent=1 // pred_check_branch
      %9 = sbr.rel (0) target = $region5
    $region4: #{tpu_custom_call.1} parent=1 // pred_region
      %s10 = sadd.s32 0, 0
      %s11 = smul.u32 2, %s10
      %s13 = ssub.s32 256, 256
      %14 = vsyncadd [#allocation4], %s13
      %s15 = smul.addr %s11, 128
      %s16 = scalar_lea.hbm %s0, %s15
      %s17 = sshll.u32 [#allocation3], 4
      %s18 = int_to_ptr.vmem [resolvable:$true] %s17
      %23 = dma.hbm_to_vmem [thread:$0]  %s16, 256, %s18, [#allocation4], 128, 128, 8
    $region5: #{tpu_custom_call.1} parent=1 // pred_fallthru
      _
    // Predicated region
    $region6: #{tpu_custom_call.1} parent=1 // pred_check
      _
    $region7: #{tpu_custom_call.1} parent=1 // pred_check_branch
      %25 = sbr.rel (0) target = $region9
    $region8: #{tpu_custom_call.1} parent=1 // pred_region
      %26 = dma.done [#allocation4], 256
    $region9: #{tpu_custom_call.1} parent=1 // pred_fallthru
      _
    %s27 = sadd.s32 0, 0
    %s28 = smul.u32 2, %s27
    %p29 = scmp.eq.s32.totalorder 0, 0
    // Predicated region
    $region10: #{tpu_custom_call.1} parent=1 // pred_check
      %p30 = pneg %p29
    $region11: #{tpu_custom_call.1} parent=1 // pred_check_branch
      %32 = sbr.rel (%p30) target = $region13
    $region12: #{tpu_custom_call.1} parent=1 // pred_region
      %vm33 = vcmask 130048
      %34 = vst.msk [vmem:[#allocation2] sm:$0xff] %vm33, 0.0
    $region13: #{tpu_custom_call.1} parent=1 // pred_fallthru
      _
    %v35 = vld [vmem:[#allocation2] sm:$0xff]
    %v36 = vld [vmem:[#allocation3] sm:$0xff]
    %v37 = vld [vmem:[#allocation3 + $0x8] sm:$0xff]
    %vm38 = vcmask 130048
    %v39 = vsel %vm38, %v36, 0.0
    %v40 = vsel %vm38, %v37, 0.0
    %v41 = vadd.f32 %v39, %v40
    %v42 = vadd.f32 %v35, %v41
    %43 = vst.msk [vmem:[#allocation2] sm:$0xff] %vm38, %v42
    // Predicated region
    $region14: #{tpu_custom_call.1} parent=1 // pred_check
      %p44 = pneg %p29
    $region15: #{tpu_custom_call.1} parent=1 // pred_check_branch
      %46 = sbr.rel (%p44) target = $region17
    $region16: #{tpu_custom_call.1} parent=1 // pred_region
      %v47 = vld [vmem:[#allocation2] sm:$0xff]
      %v48 = vsel %vm38, %v47, 0.0
      %v49 = vrot.slane %v48, 4
      %v50 = vadd.f32 %v48, %v49
      %v51 = vrot.slane %v50, 2
      %v52 = vadd.f32 %v50, %v51
      %v53 = vrot.slane %v52, 1
      %v54 = vadd.f32 %v52, %v53
      %vm55 = vcmask 122880
      %56 = vst.msk [vmem:[#allocation6] sm:$0x1] %vm55, %v54
    $region17: #{tpu_custom_call.1} parent=1 // pred_fallthru
      _
    // Predicated region
    $region18: #{tpu_custom_call.1} parent=1 // pred_check
      _
    $region19: #{tpu_custom_call.1} parent=1 // pred_check_branch
      %58 = sbr.rel (0) target = $region21
    $region20: #{tpu_custom_call.1} parent=1 // pred_region
      %s60 = ssub.s32 16, 16
      %61 = vsyncadd [#allocation5], %s60
      %s63 = sshll.u32 [#allocation6], 4
      %s64 = int_to_ptr.vmem [resolvable:$true] %s63
      %66 = dma.vmem_to_hbm [thread:$0]  %s64, 16, %s1, [#allocation5]
    $region21: #{tpu_custom_call.1} parent=1 // pred_fallthru
      _
    // Predicated region
    $region22: #{tpu_custom_call.1} parent=1 // pred_check
      _
    $region23: #{tpu_custom_call.1} parent=1 // pred_check_branch
      %68 = sbr.rel (0) target = $region25
    $region24: #{tpu_custom_call.1} parent=1 // pred_region
      %69 = dma.done [#allocation5], 16
    $region25: #{tpu_custom_call.1} parent=1 // pred_fallthru
      _
    %70 = vsyncpa [#allocation4], 1
    %71 = vsyncpa [#allocation5], 1

</llo_original>
